<compile_context>
chip_gen: v5e
topology: v5e:2x2
jax: 0.10.0
libtpu: 0.0.40
codegen_flags: <defaults>
</compile_context>

<pallas_src>
import functools

import jax
import jax.numpy as jnp
from jax import lax
from jax.experimental import pallas as pl
from jax.experimental.pallas import tpu as pltpu


def _round_up(v, m):
    return ((v + m - 1) // m) * m


def _conv_soft_argmax3d_kernel(gw_ref, gh_ref, x_ref, coords_ref, val_ref, *,
                               temperature, eps, depth, height, width):
    f32 = jnp.float32
    _, dp, pp = x_ref.shape            # tile-aligned block: dp % 8 == 0, pp % 128 == 0
    p_true = height * width
    shape = (dp, pp)

    x = x_ref[0, :, :].astype(f32)     # (dp, pp): lanes = flattened (h, w) plane

    drow = lax.broadcasted_iota(jnp.int32, shape, 0)     # depth index per sublane row

    # Global max over the valid volume == adaptive_max_pool3d(input, (1,1,1)).
    padded = (dp != depth) or (pp != p_true)
    if padded:
        lane = lax.broadcasted_iota(jnp.int32, shape, 1)
        valid = (lane < p_true) & (drow < depth)
        x_max = jnp.max(jnp.where(valid, x, jnp.finfo(jnp.float32).min))
        e = jnp.where(valid, jnp.exp((x - x_max) * (1.0 / temperature)), 0.0)
        ev = e * jnp.where(valid, x, 0.0)
    else:
        x_max = jnp.max(x)
        e = jnp.exp((x - x_max) * (1.0 / temperature))   # x_exp
        ev = e * x                                       # x_exp * input

    # Per-lane (w, h) pixel coordinates of the window centre (precomputed constants).
    wi = jnp.broadcast_to(gw_ref[...], shape)            # width coordinate, f32
    hi = jnp.broadcast_to(gh_ref[...], shape)            # height coordinate, f32
    first_w = wi == 0.0
    last_w = wi == float(width - 1)
    first_h = hi == 0.0
    last_h = hi == float(height - 1)
    first_d = drow == 0
    last_d = drow == depth - 1

    def shift_lane(a, amount, kill):
        # out[j] = a[j + amount] along the flattened (h, w) lane axis; `kill` zeroes
        # positions whose neighbour lies outside the zero-padded plane (also covers
        # the circular wrap of the roll).
        r = pltpu.roll(a, shift=(pp - amount) % pp, axis=1)
        return jnp.where(kill, 0.0, r)

    def shift_depth(a, amount, kill):
        r = pltpu.roll(a, shift=(dp - amount) % dp, axis=0)
        return jnp.where(kill, 0.0, r)

    # --- width (x) direction: 3-tap window along w ---------------------------
    e_wp = shift_lane(e, 1, last_w)            # e at w+1
    e_wm = shift_lane(e, -1, first_w)          # e at w-1
    ev_wp = shift_lane(ev, 1, last_w)
    ev_wm = shift_lane(ev, -1, first_w)
    sum_w = e_wm + e + e_wp                    # sum_ox e
    off_w = e_wp - e_wm                        # sum_ox ox * e
    val_w = ev_wm + ev + ev_wp                 # sum_ox e * x

    # --- height (y) direction: shifts by `width` lanes ------------------------
    sum_hp = shift_lane(sum_w, width, last_h)
    sum_hm = shift_lane(sum_w, -width, first_h)
    s2 = sum_hm + sum_w + sum_hp                                   # sum_{oy,ox} e
    sy2 = sum_hp - sum_hm                                          # sum oy * e
    sx2 = shift_lane(off_w, -width, first_h) + off_w + shift_lane(off_w, width, last_h)
    sv2 = shift_lane(val_w, -width, first_h) + val_w + shift_lane(val_w, width, last_h)

    # --- depth (z) direction: sublane shifts ----------------------------------
    s2_dp = shift_depth(s2, 1, last_d)
    s2_dm = shift_depth(s2, -1, first_d)
    den = s2_dm + s2 + s2_dp + eps             # 3x3x3 sum pool of x_exp, + eps
    nz = s2_dp - s2_dm                         # sum oz * e
    nx = shift_depth(sx2, -1, first_d) + sx2 + shift_depth(sx2, 1, last_d)
    ny = shift_depth(sy2, -1, first_d) + sy2 + shift_depth(sy2, 1, last_d)
    nv = shift_depth(sv2, -1, first_d) + sv2 + shift_depth(sv2, 1, last_d)

    r = pl.reciprocal(den, approx=True)
    inv = r * (2.0 - den * r)                  # one Newton step -> ~f32 accuracy

    out_dt = coords_ref.dtype
    coords_ref[0, 0, :, :] = (nz * inv + drow.astype(f32)).astype(out_dt)   # depth coord
    coords_ref[0, 1, :, :] = (nx * inv + wi).astype(out_dt)                 # x (width)
    coords_ref[0, 2, :, :] = (ny * inv + hi).astype(out_dt)                 # y (height)
    val_ref[0, :, :] = (nv * inv).astype(val_ref.dtype)


def conv_soft_argmax3d(x, temperature=1.0, eps=1e-8):
    b, c, d, h, w = x.shape
    n = b * c
    p = h * w
    dp = _round_up(d, 8)          # sublane-aligned depth block
    pp = _round_up(p, 128)        # lane-aligned flattened-plane block
    xr = x.reshape(n, d, p)

    # Per-lane window-centre coordinates for the flattened (h, w) plane.
    gw = jnp.tile(jnp.arange(w, dtype=x.dtype), h)[None, :]        # (1, p): j % w
    gh = jnp.repeat(jnp.arange(h, dtype=x.dtype), w)[None, :]      # (1, p): j // w

    kernel = functools.partial(
        _conv_soft_argmax3d_kernel, temperature=float(temperature), eps=float(eps),
        depth=d, height=h, width=w)

    coords, value = pl.pallas_call(
        kernel,
        out_shape=(jax.ShapeDtypeStruct((n, 3, d, p), x.dtype),
                   jax.ShapeDtypeStruct((n, d, p), x.dtype)),
        grid_spec=pltpu.PrefetchScalarGridSpec(
            num_scalar_prefetch=0,
            grid=(n,),
            in_specs=[pl.BlockSpec((1, pp), lambda i: (0, 0)),
                      pl.BlockSpec((1, pp), lambda i: (0, 0)),
                      pl.BlockSpec((1, dp, pp), lambda i: (i, 0, 0))],
            out_specs=(pl.BlockSpec((1, 3, dp, pp), lambda i: (i, 0, 0, 0)),
                       pl.BlockSpec((1, dp, pp), lambda i: (i, 0, 0))),
        ),
        compiler_params=pltpu.CompilerParams(dimension_semantics=("parallel",)),
    )(gw, gh, xr)
    # TODO(synk): for very large volumes, tile the grid over D with a +/-1 depth halo
    # (global max passed via scalar prefetch) so per-step blocks stay a few MiB.
    return coords.reshape(b, c, 3, d, h, w), value.reshape(b, c, d, h, w)


class ConvSoftArgmax3d:
    """Pallas port of kornia/cirtorch ConvSoftArgmax3d (default configuration only)."""

    def __init__(self, kernel_size=(3, 3, 3), stride=(1, 1, 1), padding=(1, 1, 1),
                 temperature=1.0, normalized_coordinates=False, eps=1e-8,
                 output_value=True, strict_maxima_bonus=0.0):
        assert tuple(kernel_size) == (3, 3, 3)
        assert tuple(stride) == (1, 1, 1)
        assert tuple(padding) == (1, 1, 1)
        assert not normalized_coordinates
        assert strict_maxima_bonus == 0.0
        # TODO(synk): normalized_coordinates=True and strict_maxima_bonus>0 (nms3d) paths not ported.
        self.temperature = float(temperature)
        self.eps = float(eps)
        self.output_value = output_value

    def __call__(self, x):
        coords, values = conv_soft_argmax3d(x, self.temperature, self.eps)
        if not self.output_value:
            return coords
        return coords, values


def _reference(x, temperature=1.0, eps=1e-8):
    """Pure-JAX reference mirroring the PyTorch semantics (for sanity checking)."""
    b, c, d, h, w = x.shape
    f = x.dtype
    xr = x.reshape(b * c, 1, d, h, w)
    x_max = jnp.max(xr, axis=(2, 3, 4), keepdims=True)
    e = jnp.exp((xr - x_max) / temperature)

    def sumpool(a):
        return lax.reduce_window(a, jnp.zeros((), a.dtype), lax.add,
                                 (1, 1, 3, 3, 3), (1, 1, 1, 1, 1),
                                 ((0, 0), (0, 0), (1, 1), (1, 1), (1, 1)))

    den = sumpool(e) + eps
    off = jnp.arange(3, dtype=f) - 1.0
    kz = jnp.broadcast_to(off[:, None, None], (3, 3, 3))
    ky = jnp.broadcast_to(off[None, :, None], (3, 3, 3))
    kx = jnp.broadcast_to(off[None, None, :], (3, 3, 3))
    wk = jnp.stack([kz, kx, ky], axis=0)[:, None]          # (3, 1, 3, 3, 3) OIDHW
    num = lax.conv_general_dilated(e, wk, (1, 1, 1),
                                   ((1, 1), (1, 1), (1, 1)),
                                   dimension_numbers=('NCDHW', 'OIDHW', 'NCDHW'),
                                   precision=lax.Precision.HIGHEST)
    gz = jnp.broadcast_to(jnp.arange(d, dtype=f)[:, None, None], (d, h, w))
    gy = jnp.broadcast_to(jnp.arange(h, dtype=f)[None, :, None], (d, h, w))
    gx = jnp.broadcast_to(jnp.arange(w, dtype=f)[None, None, :], (d, h, w))
    grid = jnp.stack([gz, gx, gy], axis=0)[None]           # (1, 3, d, h, w)
    coords = num / den + grid
    vals = sumpool(e * xr) / den
    return coords.reshape(b, c, 3, d, h, w), vals.reshape(b, c, d, h, w)


if __name__ == "__main__":
    key = jax.random.PRNGKey(0)
    B, C, D, H, W = 2, 4, 8, 8, 16
    x = jax.random.normal(key, (B, C, D, H, W), dtype=jnp.float32)

    module = ConvSoftArgmax3d()
    coords, values = module(x)
    coords, values = jax.block_until_ready((coords, values))

    assert coords.shape == (B, C, 3, D, H, W) and coords.dtype == jnp.float32
    assert values.shape == (B, C, D, H, W) and values.dtype == jnp.float32

    ref_coords, ref_values = _reference(x)
    assert jnp.allclose(coords, ref_coords, atol=2e-2, rtol=2e-2)
    assert jnp.allclose(values, ref_values, atol=2e-2, rtol=2e-2)

    print("KERNEL_OK")
</pallas_src>

<mosaic_0001>
module attributes {stable_mosaic.version = 11 : i64} {
  func.func @_conv_soft_argmax3d_kernel(%arg0: i32, %arg1: memref<1x128xf32, #tpu.memory_space<vmem>>, %arg2: memref<1x128xf32, #tpu.memory_space<vmem>>, %arg3: memref<1x8x128xf32, #tpu.memory_space<vmem>>, %arg4: memref<1x3x8x128xf32, #tpu.memory_space<vmem>>, %arg5: memref<1x8x128xf32, #tpu.memory_space<vmem>>) attributes {dimension_semantics = [#tpu.dimension_semantics<parallel>], iteration_bounds = array<i64: 8>, scalar_prefetch = 0 : i64, scratch_operands = 0 : i64, tpu.core_type = #tpu.core_type<tc>, window_params = [{pipeline_mode = #tpu.pipeline_mode<synchronous>, transform_indices = @transform_0, window_bounds = array<i64: 1, 128>}, {pipeline_mode = #tpu.pipeline_mode<synchronous>, transform_indices = @transform_1, window_bounds = array<i64: 1, 128>}, {transform_indices = @transform_2, window_bounds = array<i64: 1, 8, 128>}, {transform_indices = @transform_3, window_bounds = array<i64: 1, 3, 8, 128>}, {transform_indices = @transform_4, window_bounds = array<i64: 1, 8, 128>}]} {
    %c0 = arith.constant 0 : index
    %c0_0 = arith.constant 0 : index
    %c0_1 = arith.constant 0 : index
    %0 = vector.load %arg3[%c0, %c0_0, %c0_1] : memref<1x8x128xf32, #tpu.memory_space<vmem>>, vector<1x8x128xf32>
    %1 = vector.shape_cast %0 : vector<1x8x128xf32> to vector<8x128xf32>
    %2 = tpu.iota {dimensions = array<i32: 0>} : vector<8x128xi32>
    %3 = vector.shape_cast %1 : vector<8x128xf32> to vector<1x8x128xf32>
    %cst = arith.constant dense<0xFF800000> : vector<1xf32>
    %4 = vector.multi_reduction <maximumf>, %3, %cst [1, 2] : vector<1x8x128xf32> to vector<1xf32>
    %5 = vector.shape_cast %4 : vector<1xf32> to vector<1x1x1xf32>
    %6 = vector.extract %5[0, 0, 0] : f32 from vector<1x1x1xf32>
    %7 = vector.broadcast %6 : f32 to vector<8x128xf32>
    %8 = arith.subf %1, %7 : vector<8x128xf32>
    %cst_2 = arith.constant 1.000000e+00 : f32
    %9 = vector.broadcast %cst_2 : f32 to vector<8x128xf32>
    %10 = arith.mulf %8, %9 : vector<8x128xf32>
    %11 = math.exp %10 : vector<8x128xf32>
    %12 = arith.mulf %11, %1 : vector<8x128xf32>
    %c0_3 = arith.constant 0 : index
    %c0_4 = arith.constant 0 : index
    %13 = vector.load %arg1[%c0_3, %c0_4] : memref<1x128xf32, #tpu.memory_space<vmem>>, vector<1x128xf32>
    %14 = vector.shape_cast %13 : vector<1x128xf32> to vector<1x128xf32>
    %15 = vector.broadcast %14 : vector<1x128xf32> to vector<8x128xf32>
    %c0_5 = arith.constant 0 : index
    %c0_6 = arith.constant 0 : index
    %16 = vector.load %arg2[%c0_5, %c0_6] : memref<1x128xf32, #tpu.memory_space<vmem>>, vector<1x128xf32>
    %17 = vector.shape_cast %16 : vector<1x128xf32> to vector<1x128xf32>
    %18 = vector.broadcast %17 : vector<1x128xf32> to vector<8x128xf32>
    %cst_7 = arith.constant 0.000000e+00 : f32
    %19 = vector.broadcast %cst_7 : f32 to vector<8x128xf32>
    %20 = arith.cmpf oeq, %15, %19 : vector<8x128xf32>
    %cst_8 = arith.constant 1.500000e+01 : f32
    %21 = vector.broadcast %cst_8 : f32 to vector<8x128xf32>
    %22 = arith.cmpf oeq, %15, %21 : vector<8x128xf32>
    %cst_9 = arith.constant 0.000000e+00 : f32
    %23 = vector.broadcast %cst_9 : f32 to vector<8x128xf32>
    %24 = arith.cmpf oeq, %18, %23 : vector<8x128xf32>
    %cst_10 = arith.constant 7.000000e+00 : f32
    %25 = vector.broadcast %cst_10 : f32 to vector<8x128xf32>
    %26 = arith.cmpf oeq, %18, %25 : vector<8x128xf32>
    %c0_i32 = arith.constant 0 : i32
    %27 = vector.broadcast %c0_i32 : i32 to vector<8x128xi32>
    %28 = arith.cmpi eq, %2, %27 : vector<8x128xi32>
    %c7_i32 = arith.constant 7 : i32
    %29 = vector.broadcast %c7_i32 : i32 to vector<8x128xi32>
    %30 = arith.cmpi eq, %2, %29 : vector<8x128xi32>
    %c127_i32 = arith.constant 127 : i32
    %31 = tpu.dynamic_rotate %11 by %c127_i32 dim 1 : vector<8x128xf32>, i32 -> vector<8x128xf32>
    %cst_11 = arith.constant 0.000000e+00 : f32
    %32 = vector.broadcast %cst_11 : f32 to vector<8x128xf32>
    %33 = arith.select %22, %32, %31 : vector<8x128xi1>, vector<8x128xf32>
    %c1_i32 = arith.constant 1 : i32
    %34 = tpu.dynamic_rotate %11 by %c1_i32 dim 1 : vector<8x128xf32>, i32 -> vector<8x128xf32>
    %cst_12 = arith.constant 0.000000e+00 : f32
    %35 = vector.broadcast %cst_12 : f32 to vector<8x128xf32>
    %36 = arith.select %20, %35, %34 : vector<8x128xi1>, vector<8x128xf32>
    %c127_i32_13 = arith.constant 127 : i32
    %37 = tpu.dynamic_rotate %12 by %c127_i32_13 dim 1 : vector<8x128xf32>, i32 -> vector<8x128xf32>
    %cst_14 = arith.constant 0.000000e+00 : f32
    %38 = vector.broadcast %cst_14 : f32 to vector<8x128xf32>
    %39 = arith.select %22, %38, %37 : vector<8x128xi1>, vector<8x128xf32>
    %c1_i32_15 = arith.constant 1 : i32
    %40 = tpu.dynamic_rotate %12 by %c1_i32_15 dim 1 : vector<8x128xf32>, i32 -> vector<8x128xf32>
    %cst_16 = arith.constant 0.000000e+00 : f32
    %41 = vector.broadcast %cst_16 : f32 to vector<8x128xf32>
    %42 = arith.select %20, %41, %40 : vector<8x128xi1>, vector<8x128xf32>
    %43 = arith.addf %36, %11 : vector<8x128xf32>
    %44 = arith.addf %43, %33 : vector<8x128xf32>
    %45 = arith.subf %33, %36 : vector<8x128xf32>
    %46 = arith.addf %42, %12 : vector<8x128xf32>
    %47 = arith.addf %46, %39 : vector<8x128xf32>
    %c112_i32 = arith.constant 112 : i32
    %48 = tpu.dynamic_rotate %44 by %c112_i32 dim 1 : vector<8x128xf32>, i32 -> vector<8x128xf32>
    %cst_17 = arith.constant 0.000000e+00 : f32
    %49 = vector.broadcast %cst_17 : f32 to vector<8x128xf32>
    %50 = arith.select %26, %49, %48 : vector<8x128xi1>, vector<8x128xf32>
    %c16_i32 = arith.constant 16 : i32
    %51 = tpu.dynamic_rotate %44 by %c16_i32 dim 1 : vector<8x128xf32>, i32 -> vector<8x128xf32>
    %cst_18 = arith.constant 0.000000e+00 : f32
    %52 = vector.broadcast %cst_18 : f32 to vector<8x128xf32>
    %53 = arith.select %24, %52, %51 : vector<8x128xi1>, vector<8x128xf32>
    %54 = arith.addf %53, %44 : vector<8x128xf32>
    %55 = arith.addf %54, %50 : vector<8x128xf32>
    %56 = arith.subf %50, %53 : vector<8x128xf32>
    %c16_i32_19 = arith.constant 16 : i32
    %57 = tpu.dynamic_rotate %45 by %c16_i32_19 dim 1 : vector<8x128xf32>, i32 -> vector<8x128xf32>
    %cst_20 = arith.constant 0.000000e+00 : f32
    %58 = vector.broadcast %cst_20 : f32 to vector<8x128xf32>
    %59 = arith.select %24, %58, %57 : vector<8x128xi1>, vector<8x128xf32>
    %60 = arith.addf %59, %45 : vector<8x128xf32>
    %c112_i32_21 = arith.constant 112 : i32
    %61 = tpu.dynamic_rotate %45 by %c112_i32_21 dim 1 : vector<8x128xf32>, i32 -> vector<8x128xf32>
    %cst_22 = arith.constant 0.000000e+00 : f32
    %62 = vector.broadcast %cst_22 : f32 to vector<8x128xf32>
    %63 = arith.select %26, %62, %61 : vector<8x128xi1>, vector<8x128xf32>
    %64 = arith.addf %60, %63 : vector<8x128xf32>
    %c16_i32_23 = arith.constant 16 : i32
    %65 = tpu.dynamic_rotate %47 by %c16_i32_23 dim 1 : vector<8x128xf32>, i32 -> vector<8x128xf32>
    %cst_24 = arith.constant 0.000000e+00 : f32
    %66 = vector.broadcast %cst_24 : f32 to vector<8x128xf32>
    %67 = arith.select %24, %66, %65 : vector<8x128xi1>, vector<8x128xf32>
    %68 = arith.addf %67, %47 : vector<8x128xf32>
    %c112_i32_25 = arith.constant 112 : i32
    %69 = tpu.dynamic_rotate %47 by %c112_i32_25 dim 1 : vector<8x128xf32>, i32 -> vector<8x128xf32>
    %cst_26 = arith.constant 0.000000e+00 : f32
    %70 = vector.broadcast %cst_26 : f32 to vector<8x128xf32>
    %71 = arith.select %26, %70, %69 : vector<8x128xi1>, vector<8x128xf32>
    %72 = arith.addf %68, %71 : vector<8x128xf32>
    %c7_i32_27 = arith.constant 7 : i32
    %73 = tpu.dynamic_rotate %55 by %c7_i32_27 dim 0 : vector<8x128xf32>, i32 -> vector<8x128xf32>
    %cst_28 = arith.constant 0.000000e+00 : f32
    %74 = vector.broadcast %cst_28 : f32 to vector<8x128xf32>
    %75 = arith.select %30, %74, %73 : vector<8x128xi1>, vector<8x128xf32>
    %c1_i32_29 = arith.constant 1 : i32
    %76 = tpu.dynamic_rotate %55 by %c1_i32_29 dim 0 : vector<8x128xf32>, i32 -> vector<8x128xf32>
    %cst_30 = arith.constant 0.000000e+00 : f32
    %77 = vector.broadcast %cst_30 : f32 to vector<8x128xf32>
    %78 = arith.select %28, %77, %76 : vector<8x128xi1>, vector<8x128xf32>
    %79 = arith.addf %78, %55 : vector<8x128xf32>
    %80 = arith.addf %79, %75 : vector<8x128xf32>
    %cst_31 = arith.constant 9.99999993E-9 : f32
    %81 = vector.broadcast %cst_31 : f32 to vector<8x128xf32>
    %82 = arith.addf %80, %81 : vector<8x128xf32>
    %83 = arith.subf %75, %78 : vector<8x128xf32>
    %c1_i32_32 = arith.constant 1 : i32
    %84 = tpu.dynamic_rotate %64 by %c1_i32_32 dim 0 : vector<8x128xf32>, i32 -> vector<8x128xf32>
    %cst_33 = arith.constant 0.000000e+00 : f32
    %85 = vector.broadcast %cst_33 : f32 to vector<8x128xf32>
    %86 = arith.select %28, %85, %84 : vector<8x128xi1>, vector<8x128xf32>
    %87 = arith.addf %86, %64 : vector<8x128xf32>
    %c7_i32_34 = arith.constant 7 : i32
    %88 = tpu.dynamic_rotate %64 by %c7_i32_34 dim 0 : vector<8x128xf32>, i32 -> vector<8x128xf32>
    %cst_35 = arith.constant 0.000000e+00 : f32
    %89 = vector.broadcast %cst_35 : f32 to vector<8x128xf32>
    %90 = arith.select %30, %89, %88 : vector<8x128xi1>, vector<8x128xf32>
    %91 = arith.addf %87, %90 : vector<8x128xf32>
    %c1_i32_36 = arith.constant 1 : i32
    %92 = tpu.dynamic_rotate %56 by %c1_i32_36 dim 0 : vector<8x128xf32>, i32 -> vector<8x128xf32>
    %cst_37 = arith.constant 0.000000e+00 : f32
    %93 = vector.broadcast %cst_37 : f32 to vector<8x128xf32>
    %94 = arith.select %28, %93, %92 : vector<8x128xi1>, vector<8x128xf32>
    %95 = arith.addf %94, %56 : vector<8x128xf32>
    %c7_i32_38 = arith.constant 7 : i32
    %96 = tpu.dynamic_rotate %56 by %c7_i32_38 dim 0 : vector<8x128xf32>, i32 -> vector<8x128xf32>
    %cst_39 = arith.constant 0.000000e+00 : f32
    %97 = vector.broadcast %cst_39 : f32 to vector<8x128xf32>
    %98 = arith.select %30, %97, %96 : vector<8x128xi1>, vector<8x128xf32>
    %99 = arith.addf %95, %98 : vector<8x128xf32>
    %c1_i32_40 = arith.constant 1 : i32
    %100 = tpu.dynamic_rotate %72 by %c1_i32_40 dim 0 : vector<8x128xf32>, i32 -> vector<8x128xf32>
    %cst_41 = arith.constant 0.000000e+00 : f32
    %101 = vector.broadcast %cst_41 : f32 to vector<8x128xf32>
    %102 = arith.select %28, %101, %100 : vector<8x128xi1>, vector<8x128xf32>
    %103 = arith.addf %102, %72 : vector<8x128xf32>
    %c7_i32_42 = arith.constant 7 : i32
    %104 = tpu.dynamic_rotate %72 by %c7_i32_42 dim 0 : vector<8x128xf32>, i32 -> vector<8x128xf32>
    %cst_43 = arith.constant 0.000000e+00 : f32
    %105 = vector.broadcast %cst_43 : f32 to vector<8x128xf32>
    %106 = arith.select %30, %105, %104 : vector<8x128xi1>, vector<8x128xf32>
    %107 = arith.addf %103, %106 : vector<8x128xf32>
    %108 = tpu.reciprocal %82 {approx = true} : vector<8x128xf32> -> vector<8x128xf32>
    %109 = arith.mulf %82, %108 : vector<8x128xf32>
    %cst_44 = arith.constant 2.000000e+00 : f32
    %110 = vector.broadcast %cst_44 : f32 to vector<8x128xf32>
    %111 = arith.subf %110, %109 : vector<8x128xf32>
    %112 = arith.mulf %108, %111 : vector<8x128xf32>
    %113 = arith.mulf %83, %112 : vector<8x128xf32>
    %114 = arith.sitofp %2 : vector<8x128xi32> to vector<8x128xf32>
    %115 = arith.addf %113, %114 : vector<8x128xf32>
    %c0_45 = arith.constant 0 : index
    %c0_46 = arith.constant 0 : index
    %c0_47 = arith.constant 0 : index
    %c0_48 = arith.constant 0 : index
    %116 = vector.load %arg4[%c0_45, %c0_46, %c0_47, %c0_48] : memref<1x3x8x128xf32, #tpu.memory_space<vmem>>, vector<1x1x8x128xf32>
    %117 = vector.shape_cast %116 : vector<1x1x8x128xf32> to vector<8x128xf32>
    %118 = vector.shape_cast %115 : vector<8x128xf32> to vector<1x1x8x128xf32>
    tpu.vector_store %arg4[%c0_45, %c0_46, %c0_47, %c0_48], %118 {strides = array<i32>} : memref<1x3x8x128xf32, #tpu.memory_space<vmem>>, vector<1x1x8x128xf32>,
    %119 = arith.mulf %91, %112 : vector<8x128xf32>
    %120 = arith.addf %119, %15 : vector<8x128xf32>
    %c0_49 = arith.constant 0 : index
    %c1 = arith.constant 1 : index
    %c0_50 = arith.constant 0 : index
    %c0_51 = arith.constant 0 : index
    %121 = vector.load %arg4[%c0_49, %c1, %c0_50, %c0_51] : memref<1x3x8x128xf32, #tpu.memory_space<vmem>>, vector<1x1x8x128xf32>
    %122 = vector.shape_cast %121 : vector<1x1x8x128xf32> to vector<8x128xf32>
    %123 = vector.shape_cast %120 : vector<8x128xf32> to vector<1x1x8x128xf32>
    tpu.vector_store %arg4[%c0_49, %c1, %c0_50, %c0_51], %123 {strides = array<i32>} : memref<1x3x8x128xf32, #tpu.memory_space<vmem>>, vector<1x1x8x128xf32>,
    %124 = arith.mulf %99, %112 : vector<8x128xf32>
    %125 = arith.addf %124, %18 : vector<8x128xf32>
    %c0_52 = arith.constant 0 : index
    %c2 = arith.constant 2 : index
    %c0_53 = arith.constant 0 : index
    %c0_54 = arith.constant 0 : index
    %126 = vector.load %arg4[%c0_52, %c2, %c0_53, %c0_54] : memref<1x3x8x128xf32, #tpu.memory_space<vmem>>, vector<1x1x8x128xf32>
    %127 = vector.shape_cast %126 : vector<1x1x8x128xf32> to vector<8x128xf32>
    %128 = vector.shape_cast %125 : vector<8x128xf32> to vector<1x1x8x128xf32>
    tpu.vector_store %arg4[%c0_52, %c2, %c0_53, %c0_54], %128 {strides = array<i32>} : memref<1x3x8x128xf32, #tpu.memory_space<vmem>>, vector<1x1x8x128xf32>,
    %129 = arith.mulf %107, %112 : vector<8x128xf32>
    %c0_55 = arith.constant 0 : index
    %c0_56 = arith.constant 0 : index
    %c0_57 = arith.constant 0 : index
    %130 = vector.load %arg5[%c0_55, %c0_56, %c0_57] : memref<1x8x128xf32, #tpu.memory_space<vmem>>, vector<1x8x128xf32>
    %131 = vector.shape_cast %130 : vector<1x8x128xf32> to vector<8x128xf32>
    %132 = vector.shape_cast %129 : vector<8x128xf32> to vector<1x8x128xf32>
    tpu.vector_store %arg5[%c0_55, %c0_56, %c0_57], %132 {strides = array<i32>} : memref<1x8x128xf32, #tpu.memory_space<vmem>>, vector<1x8x128xf32>,
    return
  }
  func.func @transform_0(%arg0: i32) -> (i32, i32) {
    %c0_i32 = arith.constant 0 : i32
    %c0_i32_0 = arith.constant 0 : i32
    %c0_i32_1 = arith.constant 0 : i32
    return %c0_i32, %c0_i32_0 : i32, i32
  }
  func.func @transform_1(%arg0: i32) -> (i32, i32) {
    %c0_i32 = arith.constant 0 : i32
    %c0_i32_0 = arith.constant 0 : i32
    %c0_i32_1 = arith.constant 0 : i32
    return %c0_i32, %c0_i32_0 : i32, i32
  }
  func.func @transform_2(%arg0: i32) -> (i32, i32, i32) {
    %c0_i32 = arith.constant 0 : i32
    %c0_i32_0 = arith.constant 0 : i32
    %c0_i32_1 = arith.constant 0 : i32
    return %arg0, %c0_i32, %c0_i32_0 : i32, i32, i32
  }
  func.func @transform_3(%arg0: i32) -> (i32, i32, i32, i32) {
    %c0_i32 = arith.constant 0 : i32
    %c0_i32_0 = arith.constant 0 : i32
    %c0_i32_1 = arith.constant 0 : i32
    %c0_i32_2 = arith.constant 0 : i32
    return %arg0, %c0_i32, %c0_i32_0, %c0_i32_1 : i32, i32, i32, i32
  }
  func.func @transform_4(%arg0: i32) -> (i32, i32, i32) {
    %c0_i32 = arith.constant 0 : i32
    %c0_i32_0 = arith.constant 0 : i32
    %c0_i32_1 = arith.constant 0 : i32
    return %arg0, %c0_i32, %c0_i32_0 : i32, i32, i32
  }
}

</mosaic_0001>

<llo_original>
// kernel: tpu_custom_call.1
$region0: #{tpu_custom_call.1}
  #allocation0 [shape = 'u32[]', space=smem, size = 0x4, offset = 0x4, fixed_abs, tag = 'smem constant byte address 0x4 - core index']
  #allocation1 [shape = 'u32[72,128]{1,0:T(1,128)}', space=vmem, size = 0x9000, scoped, tag = 'internal scratch']
  %s0 = inlined_call_operand.hbm [shape: f32[1,128], index: 0, kind: input, shape index: {}]
  %s1 = inlined_call_operand.hbm [shape: f32[1,128], index: 1, kind: input, shape index: {}]
  %s2 = inlined_call_operand.hbm [shape: f32[8,8,128], index: 2, kind: input, shape index: {}]
  %s3 = inlined_call_operand.hbm [shape: f32[8,3,8,128], index: 3, kind: output, shape index: {0}]
  %s4 = inlined_call_operand.hbm [shape: f32[8,8,128], index: 4, kind: output, shape index: {1}]
  %5 = xla_tuple %s3, %s4
  %s6 = sld [smem:[#allocation0]]
  $region65: #{tpu_custom_call.1} parent=0
    _
  %s8 = ssub.s32 1, %s6
  %s9 = scalar_select 0, %s8, %s6
  $region1: #{tpu_custom_call.1} parent=0
    #allocation2 [shape = 'u8[512]{0}', space=vmem, size = 0x400, scoped, tag = 'input window, operand 0, single buffered']
    #allocation3 [shape = 's32[2]{0}', space=sflag, size = 0x8, scoped, tag = 'scoped memory for tpu_custom_call.1']
    #allocation4 [shape = 's32[2]{0}', space=sflag, size = 0x8, scoped, tag = 'scoped memory for tpu_custom_call.1']
    #allocation5 [shape = 'u8[512]{0}', space=vmem, size = 0x400, scoped, tag = 'input window, operand 1, single buffered']
    #allocation6 [shape = 's32[1]{0}', space=sflag, size = 0x4, scoped, tag = 'scoped memory for tpu_custom_call.1']
    #allocation7 [shape = 'u8[8192]{0}', space=vmem, size = 0x2000, scoped, tag = 'input window, operand 2']
    #allocation8 [shape = 'u8[24576]{0}', space=vmem, size = 0x6000, scoped, tag = 'output window, operand 0']
    #allocation9 [shape = 'u8[8192]{0}', space=vmem, size = 0x2000, scoped, tag = 'output window, operand 1']
    #allocation10 [shape = 's32[2]{0}', space=sflag, size = 0x8, scoped, tag = 'scoped memory for tpu_custom_call.1']
    %10 = vsyncpa [#allocation3], 0
    %11 = vsyncpa [#allocation6], 0
    %12 = vsyncpa [#allocation4], 0
    %s13 = scalar_lea.sflag [#allocation4], 1
    %14 = vsyncpa %s13, 0
    %15 = vsyncpa [#allocation10], 0
    %s16 = scalar_lea.sflag [#allocation10], 1
    %17 = vsyncpa %s16, 0
    loop: start=0, step=1, limit=10
    $region2: #{tpu_custom_call.1} parent=1 // loop_pre_header
      _
    $region3: #{tpu_custom_call.1} parent=1 // loop_header
      %s19 = sphi 0, %s23
      %p20 = scmp.ge.s32.totalorder %s19, 10
      %s27 = sphi 0, %s27
      %s29 = sphi 0, %s27
      %s30 = sphi 0, %s29
      %s44 = sphi 0, %s30
      %s48 = sphi 0, %s48
      %s50 = sphi 0, %s48
      %s51 = sphi 0, %s50
      %s65 = sphi 0, %s51
      %s71 = sphi 0, %s73
      %s74 = sphi 0, %s71
      %s75 = sphi 0, %s74
      %s91 = sphi 0, %s75
      %s97 = sphi 0, %s99
      %s100 = sphi 0, %s97
      %s101 = sphi 0, %s100
      %s117 = sphi 0, %s101
      %s123 = sphi 0, %s125
      %s126 = sphi 0, %s123
      %s127 = sphi 0, %s126
      %s143 = sphi 0, %s127
    $region4: #{tpu_custom_call.1} parent=1 // loop_header_branch
      %22 = sbr.rel (%p20) target = $region8
    $region5: #{tpu_custom_call.1} parent=1 // loop_body
      %s24 = ssub.s32 %s19, 1
      %s25 = ssub.s32 %s19, 2
      %s26 = sadd.s32 %s19, 1
      %s28 = sadd.s32 %s27, 1
      %p31 = scmp.eq.s32.totalorder %s19, 7
      %p32 = scmp.ne.s32.totalorder %s27, %s29
      %p33 = scmp.eq.s32.totalorder %s19, 0
      %p34 = por %p32, %p33
      %p35 = scmp.ne.s32.totalorder %s27, %s29
      %p36 = scmp.eq.s32.totalorder %s24, 7
      %p37 = por %p35, %p36
      %p38 = scmp.ne.s32.totalorder %s29, %s30
      %p39 = scmp.eq.s32.totalorder %s24, 0
      %p40 = por %p38, %p39
      %p41 = scmp.ne.s32.totalorder %s29, %s30
      %p42 = scmp.eq.s32.totalorder %s25, 7
      %p43 = por %p41, %p42
      %p45 = scmp.ne.s32.totalorder %s30, %s44
      %p46 = scmp.eq.s32.totalorder %s25, 0
      %p47 = por %p45, %p46
      %s49 = sadd.s32 %s48, 1
      %p52 = scmp.eq.s32.totalorder %s19, 7
      %p53 = scmp.ne.s32.totalorder %s48, %s50
      %p54 = scmp.eq.s32.totalorder %s19, 0
      %p55 = por %p53, %p54
      %p56 = scmp.ne.s32.totalorder %s48, %s50
      %p57 = scmp.eq.s32.totalorder %s24, 7
      %p58 = por %p56, %p57
      %p59 = scmp.ne.s32.totalorder %s50, %s51
      %p60 = scmp.eq.s32.totalorder %s24, 0
      %p61 = por %p59, %p60
      %p62 = scmp.ne.s32.totalorder %s50, %s51
      %p63 = scmp.eq.s32.totalorder %s25, 7
      %p64 = por %p62, %p63
      %p66 = scmp.ne.s32.totalorder %s51, %s65
      %p67 = scmp.eq.s32.totalorder %s25, 0
      %p68 = por %p66, %p67
      %s69 = ssub.s32 %s19, %s26
      %p70 = scmp.eq.s32.totalorder %s69, 0
      %s72 = sadd.s32 %s71, 1
      %s73 = scalar_select %p70, %s71, %s72
      %p76 = pneg %p70
      %p77 = scmp.eq.s32.totalorder %s19, 7
      %p78 = por %p76, %p77
      %p79 = scmp.ne.s32.totalorder %s71, %s74
      %p80 = scmp.eq.s32.totalorder %s19, 0
      %p81 = por %p79, %p80
      %p82 = scmp.ne.s32.totalorder %s71, %s74
      %p83 = scmp.eq.s32.totalorder %s24, 7
      %p84 = por %p82, %p83
      %p85 = scmp.ne.s32.totalorder %s74, %s75
      %p86 = scmp.eq.s32.totalorder %s24, 0
      %p87 = por %p85, %p86
      %p88 = scmp.ne.s32.totalorder %s74, %s75
      %p89 = scmp.eq.s32.totalorder %s25, 7
      %p90 = por %p88, %p89
      %p92 = scmp.ne.s32.totalorder %s75, %s91
      %p93 = scmp.eq.s32.totalorder %s25, 0
      %p94 = por %p92, %p93
      %s95 = ssub.s32 %s19, %s26
      %p96 = scmp.eq.s32.totalorder %s95, 0
      %s98 = sadd.s32 %s97, 1
      %s99 = scalar_select %p96, %s97, %s98
      %p102 = pneg %p96
      %p103 = scmp.eq.s32.totalorder %s19, 7
      %p104 = por %p102, %p103
      %p105 = scmp.ne.s32.totalorder %s97, %s100
      %p106 = scmp.eq.s32.totalorder %s19, 0
      %p107 = por %p105, %p106
      %p108 = scmp.ne.s32.totalorder %s97, %s100
      %p109 = scmp.eq.s32.totalorder %s24, 7
      %p110 = por %p108, %p109
      %p111 = scmp.ne.s32.totalorder %s100, %s101
      %p112 = scmp.eq.s32.totalorder %s24, 0
      %p113 = por %p111, %p112
      %p114 = scmp.ne.s32.totalorder %s100, %s101
      %p115 = scmp.eq.s32.totalorder %s25, 7
      %p116 = por %p114, %p115
      %p118 = scmp.ne.s32.totalorder %s101, %s117
      %p119 = scmp.eq.s32.totalorder %s25, 0
      %p120 = por %p118, %p119
      %s121 = ssub.s32 %s19, %s26
      %p122 = scmp.eq.s32.totalorder %s121, 0
      %s124 = sadd.s32 %s123, 1
      %s125 = scalar_select %p122, %s123, %s124
      %p128 = pneg %p122
      %p129 = scmp.eq.s32.totalorder %s19, 7
      %p130 = por %p128, %p129
      %p131 = scmp.ne.s32.totalorder %s123, %s126
      %p132 = scmp.eq.s32.totalorder %s19, 0
      %p133 = por %p131, %p132
      %p134 = scmp.ne.s32.totalorder %s123, %s126
      %p135 = scmp.eq.s32.totalorder %s24, 7
      %p136 = por %p134, %p135
      %p137 = scmp.ne.s32.totalorder %s126, %s127
      %p138 = scmp.eq.s32.totalorder %s24, 0
      %p139 = por %p137, %p138
      %p140 = scmp.ne.s32.totalorder %s126, %s127
      %p141 = scmp.eq.s32.totalorder %s25, 7
      %p142 = por %p140, %p141
      %p144 = scmp.ne.s32.totalorder %s127, %s143
      %p145 = scmp.eq.s32.totalorder %s25, 0
      %p146 = por %p144, %p145
      %p147 = scmp.le.s32.totalorder 1, %s19
      %p148 = scmp.lt.s32.totalorder %s19, 9
      %p149 = pnand %p147, %p148
      %p150 = pneg %p149
      // Predicated region
      $region9: #{tpu_custom_call.1} parent=5 // pred_check
        _
      $region10: #{tpu_custom_call.1} parent=5 // pred_check_branch
        %152 = sbr.rel (%p149) target = $region12
      $region11: #{tpu_custom_call.1} parent=5 // pred_region
        %s153 = ssub.s32 %s19, 1
        // Predicated region
        $region13: #{tpu_custom_call.1} parent=11 // pred_check
          %p154 = pneg %p40
        $region14: #{tpu_custom_call.1} parent=11 // pred_check_branch
          %156 = sbr.rel (%p154) target = $region16
        $region15: #{tpu_custom_call.1} parent=11 // pred_region
          %158 = vsyncadd [#allocation3], 0
          %s160 = sshll.u32 %s0, 4
          %s161 = int_to_ptr.hbm [resolvable:$true] %s160
          %s162 = sshll.u32 [#allocation2], 4
          %s163 = int_to_ptr.vmem [resolvable:$true] %s162
          %165 = dma.hbm_to_vmem [thread:$0]  %s161, 16, %s163, [#allocation3]
        $region16: #{tpu_custom_call.1} parent=11 // pred_fallthru
          _
        // Predicated region
        $region17: #{tpu_custom_call.1} parent=11 // pred_check
          %p166 = pneg %p61
        $region18: #{tpu_custom_call.1} parent=11 // pred_check_branch
          %168 = sbr.rel (%p166) target = $region20
        $region19: #{tpu_custom_call.1} parent=11 // pred_region
          %170 = vsyncadd [#allocation6], 0
          %s172 = sshll.u32 %s1, 4
          %s173 = int_to_ptr.hbm [resolvable:$true] %s172
          %s174 = sshll.u32 [#allocation5], 4
          %s175 = int_to_ptr.vmem [resolvable:$true] %s174
          %177 = dma.hbm_to_vmem [thread:$0]  %s173, 16, %s175, [#allocation6]
        $region20: #{tpu_custom_call.1} parent=11 // pred_fallthru
          _
      $region12: #{tpu_custom_call.1} parent=5 // pred_fallthru
        _
      %p178 = scmp.lt.s32.totalorder %s19, 8
      // Predicated region
      $region21: #{tpu_custom_call.1} parent=5 // pred_check
        %p179 = pneg %p178
      $region22: #{tpu_custom_call.1} parent=5 // pred_check_branch
        %181 = sbr.rel (%p179) target = $region24
      $region23: #{tpu_custom_call.1} parent=5 // pred_region
        // Predicated region
        $region25: #{tpu_custom_call.1} parent=23 // pred_check
          %p182 = pneg %p81
        $region26: #{tpu_custom_call.1} parent=23 // pred_check_branch
          %184 = sbr.rel (%p182) target = $region28
        $region27: #{tpu_custom_call.1} parent=23 // pred_region
          %s185 = sand.u32 %s19, 1
          %s186 = scalar_lea.sflag [#allocation3], %s185
          %s187 = sand.u32 %s71, 1
          %s188 = smul.addr %s187, 8
          %s189 = scalar_lea.vmem [#allocation7], %s188
          %191 = vsyncadd %s186, 0
          %s192 = smul.addr %s19, 8
          %s193 = scalar_lea.hbm %s2, %s192
          %s195 = sshll.u32 %s193, 4
          %s196 = int_to_ptr.hbm [resolvable:$true] %s195
          %s197 = sshll.u32 %s189, 4
          %s198 = int_to_ptr.vmem [resolvable:$true] %s197
          %200 = dma.hbm_to_vmem [thread:$0]  %s196, 128, %s198, %s186
        $region28: #{tpu_custom_call.1} parent=23 // pred_fallthru
          _
      $region24: #{tpu_custom_call.1} parent=5 // pred_fallthru
        _
      %p201 = scmp.le.s32.totalorder 1, %s19
      %p202 = scmp.lt.s32.totalorder %s19, 9
      %p203 = pnand %p201, %p202
      %p204 = pneg %p203
      // Predicated region
      $region29: #{tpu_custom_call.1} parent=5 // pred_check
        _
      $region30: #{tpu_custom_call.1} parent=5 // pred_check_branch
        %206 = sbr.rel (%p203) target = $region32
      $region31: #{tpu_custom_call.1} parent=5 // pred_region
        %s207 = ssub.s32 %s19, 1
        // Predicated region
        $region33: #{tpu_custom_call.1} parent=31 // pred_check
          %p208 = pneg %p40
        $region34: #{tpu_custom_call.1} parent=31 // pred_check_branch
          %210 = sbr.rel (%p208) target = $region36
        $region35: #{tpu_custom_call.1} parent=31 // pred_region
          %212 = dma.done [#allocation3], 16
        $region36: #{tpu_custom_call.1} parent=31 // pred_fallthru
          _
        // Predicated region
        $region37: #{tpu_custom_call.1} parent=31 // pred_check
          %p213 = pneg %p61
        $region38: #{tpu_custom_call.1} parent=31 // pred_check_branch
          %215 = sbr.rel (%p213) target = $region40
        $region39: #{tpu_custom_call.1} parent=31 // pred_region
          %217 = dma.done [#allocation6], 16
        $region40: #{tpu_custom_call.1} parent=31 // pred_fallthru
          _
        %s218 = sand.u32 %s24, 1
        %s219 = scalar_lea.sflag [#allocation3], %s218
        %s220 = sand.u32 %s74, 1
        %s221 = smul.addr %s220, 8
        %s222 = scalar_lea.vmem [#allocation7], %s221
        // Predicated region
        $region41: #{tpu_custom_call.1} parent=31 // pred_check
          %p223 = pneg %p87
        $region42: #{tpu_custom_call.1} parent=31 // pred_check_branch
          %225 = sbr.rel (%p223) target = $region44
        $region43: #{tpu_custom_call.1} parent=31 // pred_region
          %227 = dma.done %s219, 128
        $region44: #{tpu_custom_call.1} parent=31 // pred_fallthru
          _
        %p228 = pneg %p40
        %p229 = pneg %p37
        %p230 = pneg %p61
        %p231 = pneg %p58
        %s232 = sand.u32 %s24, 1
        %s233 = scalar_lea.sflag [#allocation3], %s232
        %s234 = sand.u32 %s74, 1
        %s235 = smul.addr %s234, 8
        %s236 = scalar_lea.vmem [#allocation7], %s235
        %p237 = pneg %p87
        %p238 = pneg %p84
        %p239 = pneg %p113
        %p240 = pneg %p110
        %s241 = sand.u32 %s100, 1
        %s242 = scalar_lea.sflag [#allocation4], %s241
        %s243 = sand.u32 %s100, 1
        %s244 = smul.addr %s243, 24
        %s245 = scalar_lea.vmem [#allocation8], %s244
        %p246 = pneg %p139
        %p247 = pneg %p136
        %s248 = sand.u32 %s126, 1
        %s249 = scalar_lea.sflag [#allocation10], %s248
        %s250 = sand.u32 %s126, 1
        %s251 = smul.addr %s250, 8
        %s252 = scalar_lea.vmem [#allocation9], %s251
        %v253 = vld [vmem:[%s222] sm:$0xff]
        %v254 = vlaneseq
        %v255 = vshrl.u32 %v254, 7
        %256 = vmax.xlane.f32.xlu0 %v253
        %v257 = vpop.xlane.xlu0 %256
        %v258 = vrot.slane %v257, 4
        %v259 = vmax.f32 %v257, %v258
        %v260 = vrot.slane %v259, 2
        %v261 = vmax.f32 %v259, %v260
        %v262 = vrot.slane %v261, 1
        %v263 = vmax.f32 %v261, %v262
        %s264 = vtos %v263
        %v265 = vstv %s264
        %v266 = vsub.f32 %v253, %v265
        %v267 = vmul.f32 %v266, 1.442695
        %v268 = vpow.pop %v267
        %v269 = vmul.f32 %v268, %v253
        %v270 = vld [vmem:[#allocation2] sm:$0x1]
        %v272 = vperm.slane %v270, 0
        %v274 = vld [vmem:[#allocation5] sm:$0x1]
        %v276 = vperm.slane %v274, 0
        %vm278 = vcmp.eq.f32.partialorder %v272, 0.0
        %vm279 = vcmp.eq.f32.partialorder %v272, 15.0
        %vm280 = vcmp.eq.f32.partialorder %v276, 0.0
        %vm281 = vcmp.eq.f32.partialorder %v276, 7.0
        %vm282 = vcmp.eq.s32.totalorder %v255, 0
        %vm283 = vcmp.eq.s32.totalorder %v255, 7
        %284 = vrot.lane.b32.xlu0 %v268, 127
        %v285 = vpop.permute.xlu0 %284
        %v286 = vsel %vm279, 0.0, %v285
        %287 = vrot.lane.b32.xlu0 %v268, 1
        %v288 = vpop.permute.xlu0 %287
        %v289 = vsel %vm278, 0.0, %v288
        %290 = vrot.lane.b32.xlu0 %v269, 127
        %v291 = vpop.permute.xlu0 %290
        %v292 = vsel %vm279, 0.0, %v291
        %293 = vrot.lane.b32.xlu0 %v269, 1
        %v294 = vpop.permute.xlu0 %293
        %v295 = vsel %vm278, 0.0, %v294
        %v296 = vadd.f32 %v289, %v268
        %v297 = vadd.f32 %v296, %v286
        %v298 = vsub.f32 %v286, %v289
        %v299 = vadd.f32 %v295, %v269
        %v300 = vadd.f32 %v299, %v292
        %301 = vrot.lane.b32.xlu0 %v297, 112
        %v302 = vpop.permute.xlu0 %301
        %v303 = vsel %vm281, 0.0, %v302
        %304 = vrot.lane.b32.xlu0 %v297, 16
        %v305 = vpop.permute.xlu0 %304
        %v306 = vsel %vm280, 0.0, %v305
        %v307 = vadd.f32 %v306, %v297
        %v308 = vadd.f32 %v307, %v303
        %v309 = vsub.f32 %v303, %v306
        %310 = vrot.lane.b32.xlu0 %v298, 16
        %v311 = vpop.permute.xlu0 %310
        %v312 = vsel %vm280, 0.0, %v311
        %v313 = vadd.f32 %v312, %v298
        %314 = vrot.lane.b32.xlu0 %v298, 112
        %v315 = vpop.permute.xlu0 %314
        %v316 = vsel %vm281, 0.0, %v315
        %v317 = vadd.f32 %v313, %v316
        %318 = vrot.lane.b32.xlu0 %v300, 16
        %v319 = vpop.permute.xlu0 %318
        %v320 = vsel %vm280, 0.0, %v319
        %v321 = vadd.f32 %v320, %v300
        %322 = vrot.lane.b32.xlu0 %v300, 112
        %v323 = vpop.permute.xlu0 %322
        %v324 = vsel %vm281, 0.0, %v323
        %v325 = vadd.f32 %v321, %v324
        %v326 = vrot.slane %v308, 1
        %v327 = vsel %vm283, 0.0, %v326
        %v328 = vrot.slane %v308, 7
        %v329 = vsel %vm282, 0.0, %v328
        %v330 = vadd.f32 %v329, %v308
        %v331 = vadd.f32 %v330, %v327
        %v332 = vadd.f32 %v331, 1e-08
        %v333 = vsub.f32 %v327, %v329
        %v334 = vrot.slane %v317, 7
        %v335 = vsel %vm282, 0.0, %v334
        %v336 = vadd.f32 %v335, %v317
        %v337 = vrot.slane %v317, 1
        %v338 = vsel %vm283, 0.0, %v337
        %v339 = vadd.f32 %v336, %v338
        %v340 = vrot.slane %v309, 7
        %v341 = vsel %vm282, 0.0, %v340
        %v342 = vadd.f32 %v341, %v309
        %v343 = vrot.slane %v309, 1
        %v344 = vsel %vm283, 0.0, %v343
        %v345 = vadd.f32 %v342, %v344
        %v346 = vrot.slane %v325, 7
        %v347 = vsel %vm282, 0.0, %v346
        %v348 = vadd.f32 %v347, %v325
        %v349 = vrot.slane %v325, 1
        %v350 = vsel %vm283, 0.0, %v349
        %v351 = vadd.f32 %v348, %v350
        %v352 = vrcp.pop %v332
        %v353 = vmul.f32 %v332, %v352
        %v354 = vsub.f32 2.0, %v353
        %v355 = vmul.f32 %v352, %v354
        %v356 = vmul.f32 %v333, %v355
        %v357 = vcvt.s32.f32 %v255
        %v358 = vadd.f32 %v356, %v357
        %359 = vst [vmem:[%s245] sm:$0xff] %v358
        %v360 = vmul.f32 %v339, %v355
        %v361 = vadd.f32 %v360, %v272
        %s362 = scalar_lea.vmem %s245, 8 [#allocation8]
        %363 = vst [vmem:[%s362] sm:$0xff] %v361
        %v364 = vmul.f32 %v345, %v355
        %v365 = vadd.f32 %v364, %v276
        %s366 = scalar_lea.vmem %s245, 16 [#allocation8]
        %367 = vst [vmem:[%s366] sm:$0xff] %v365
        %v368 = vmul.f32 %v351, %v355
        %369 = vst [vmem:[%s252] sm:$0xff] %v368
        %s370 = sand.u32 %s100, 1
        %s371 = scalar_lea.sflag [#allocation4], %s370
        %s372 = sand.u32 %s100, 1
        %s373 = smul.addr %s372, 24
        %s374 = scalar_lea.vmem [#allocation8], %s373
        %s375 = sand.u32 %s126, 1
        %s376 = scalar_lea.sflag [#allocation10], %s375
        %s377 = sand.u32 %s126, 1
        %s378 = smul.addr %s377, 8
        %s379 = scalar_lea.vmem [#allocation9], %s378
        // Predicated region
        $region45: #{tpu_custom_call.1} parent=31 // pred_check
          %p380 = pneg %p110
        $region46: #{tpu_custom_call.1} parent=31 // pred_check_branch
          %382 = sbr.rel (%p380) target = $region48
        $region47: #{tpu_custom_call.1} parent=31 // pred_region
          %384 = vsyncadd %s371, 0
          %s385 = smul.addr %s24, 3
          %s386 = smul.addr %s385, 8
          %s387 = scalar_lea.hbm %s3, %s386
          %s388 = sshll.u32 %s374, 4
          %s389 = int_to_ptr.vmem [resolvable:$true] %s388
          %s390 = sshll.u32 %s387, 4
          %s391 = int_to_ptr.hbm [resolvable:$true] %s390
          %396 = dma.vmem_to_hbm [thread:$0]  %s389, 384, %s391, %s371, 128, 128, 8
        $region48: #{tpu_custom_call.1} parent=31 // pred_fallthru
          _
        // Predicated region
        $region49: #{tpu_custom_call.1} parent=31 // pred_check
          %p397 = pneg %p136
        $region50: #{tpu_custom_call.1} parent=31 // pred_check_branch
          %399 = sbr.rel (%p397) target = $region52
        $region51: #{tpu_custom_call.1} parent=31 // pred_region
          %401 = vsyncadd %s376, 0
          %s402 = smul.addr %s24, 8
          %s403 = scalar_lea.hbm %s4, %s402
          %s405 = sshll.u32 %s379, 4
          %s406 = int_to_ptr.vmem [resolvable:$true] %s405
          %s407 = sshll.u32 %s403, 4
          %s408 = int_to_ptr.hbm [resolvable:$true] %s407
          %410 = dma.vmem_to_hbm [thread:$0]  %s406, 128, %s408, %s376
        $region52: #{tpu_custom_call.1} parent=31 // pred_fallthru
          _
      $region32: #{tpu_custom_call.1} parent=5 // pred_fallthru
        _
      %p411 = scmp.le.s32.totalorder 2, %s19
      // Predicated region
      $region53: #{tpu_custom_call.1} parent=5 // pred_check
        %p412 = pneg %p411
      $region54: #{tpu_custom_call.1} parent=5 // pred_check_branch
        %414 = sbr.rel (%p412) target = $region56
      $region55: #{tpu_custom_call.1} parent=5 // pred_region
        %s415 = ssub.s32 %s19, 2
        // Predicated region
        $region57: #{tpu_custom_call.1} parent=55 // pred_check
          %p416 = pneg %p116
        $region58: #{tpu_custom_call.1} parent=55 // pred_check_branch
          %418 = sbr.rel (%p416) target = $region60
        $region59: #{tpu_custom_call.1} parent=55 // pred_region
          %s419 = sand.u32 %s101, 1
          %s420 = scalar_lea.sflag [#allocation4], %s419
          %s421 = sand.u32 %s101, 1
          %s422 = smul.addr %s421, 24
          %s423 = scalar_lea.vmem [#allocation8], %s422
          %425 = dma.done %s420, 384
        $region60: #{tpu_custom_call.1} parent=55 // pred_fallthru
          _
        // Predicated region
        $region61: #{tpu_custom_call.1} parent=55 // pred_check
          %p426 = pneg %p142
        $region62: #{tpu_custom_call.1} parent=55 // pred_check_branch
          %428 = sbr.rel (%p426) target = $region64
        $region63: #{tpu_custom_call.1} parent=55 // pred_region
          %s429 = sand.u32 %s127, 1
          %s430 = scalar_lea.sflag [#allocation10], %s429
          %s431 = sand.u32 %s127, 1
          %s432 = smul.addr %s431, 8
          %s433 = scalar_lea.vmem [#allocation9], %s432
          %435 = dma.done %s430, 128
        $region64: #{tpu_custom_call.1} parent=55 // pred_fallthru
          _
      $region56: #{tpu_custom_call.1} parent=5 // pred_fallthru
        _
    $region6: #{tpu_custom_call.1} parent=1 // loop_footer
      %s23 = sadd.s32 1, %s19
    $region7: #{tpu_custom_call.1} parent=1 // loop_footer_branch
      %18 = sbr.rel target = $region3
    $region8: #{tpu_custom_call.1} parent=1 // loop_exit
      _
    %436 = vsyncpa [#allocation3], 1
    %s437 = scalar_lea.sflag [#allocation3], 1
    %438 = vsyncpa %s437, 1
    %439 = vsyncpa [#allocation6], 1
    %440 = vsyncpa [#allocation4], 1
    %s441 = scalar_lea.sflag [#allocation4], 1
    %442 = vsyncpa %s441, 1
    %443 = vsyncpa [#allocation10], 1
    %s444 = scalar_lea.sflag [#allocation10], 1
    %445 = vsyncpa %s444, 1

</llo_original>
